<compile_context>
chip_gen: v7x
topology: tpu7x:2x2x1
jax: 0.10.0
libtpu: 0.0.40
codegen_flags: <defaults>
</compile_context>

<pallas_src>
import jax
import jax.numpy as jnp
from jax import lax
from jax.experimental import pallas as pl
from jax.experimental.pallas import tpu as pltpu

LANE = 128
SUBLANE = 8
COMPUTE_DTYPE = jnp.bfloat16   # MXU operands / weights / x / gi storage; gate math stays f32
B_TILE_MAX = 128               # MXU-native M
TC_MAX = 64                    # time-chunk length (gi scratch granularity)
VMEM_BUDGET = 32 << 20         # target footprint when picking Tc
VMEM_CAP = 56 << 20            # leave headroom under v7x's 64 MiB physical VMEM


def _round_up(x, m):
    return ((x + m - 1) // m) * m


def _vmem_estimate(Tc, Bt, Ep, Hp, Op, cd_bytes, gi_bytes):
    x_block = 2 * Tc * Bt * Ep * cd_bytes                          # double-buffered x chunk
    gi = Tc * Bt * 3 * Hp * gi_bytes                                # gi scratch
    weights = 2 * (Ep * 3 * Hp + Hp * 3 * Hp + Hp * Op) * cd_bytes  # resident (dbuf'd) weights
    small = (2 * Bt * Hp * 4          # h0
             + Bt * Hp * 4            # hidden carry scratch
             + 2 * Bt * Op * 4        # out block
             + 2 * (3 * Hp + Hp + Op) * 4   # biases
             + 2 * SUBLANE * LANE * 4)      # lens (padded vreg tile)
    return x_block + gi + weights + small


def gru_encoder_kernel(tile_steps_ref,                  # SMEM (num_b_tiles,) int32
                       x_ref, lens_ref, h0_ref,
                       w_ih_ref, w_hh_ref, b_gi_ref, b_hn_ref,
                       w_fc_ref, b_fc_ref,
                       out_ref,
                       gi_scratch, h_scratch):
    """One (batch-tile, time-chunk) grid step; hidden carry lives in scratch."""
    Tc, Bt, Ep = x_ref.shape
    Hp = h_scratch.shape[-1]

    b = pl.program_id(0)
    tc = pl.program_id(1)

    @pl.when(tc == 0)
    def _():
        h_scratch[...] = h0_ref[...]

    chunk_start = tc * Tc
    steps_here = jnp.clip(tile_steps_ref[b] - chunk_start, 0, Tc)

    @pl.when(steps_here > 0)
    def _():
        # ---- hoisted input projection for this time chunk: one MXU matmul,
        # off the serial path (f32 accumulation, stored in gi_scratch dtype).
        x2 = x_ref[...].reshape(Tc * Bt, Ep)
        gi = jnp.dot(x2, w_ih_ref[...], preferred_element_type=jnp.float32)
        gi = gi + b_gi_ref[...]                            # r/z biases pre-combined (f32)
        gi_scratch[...] = gi.reshape(Tc, Bt, 3 * Hp).astype(gi_scratch.dtype)

        lens = lens_ref[...]                               # (Bt, 1) int32
        b_hn = jnp.broadcast_to(b_hn_ref[...], (Bt, Hp))   # f32, hoisted out of loop

        # ---- serial recurrence, bounded by this tile's own max length ----
        # TODO(synk): drive the MXU explicitly (pltpu.matmul_push_rhs once
        # before the loop + matmul_acc_lhs/matmul_pop per step) so W_hh stays
        # resident in the MXU staging registers instead of being re-pushed
        # each iteration; do NOT hoist w_hh_ref[...] into vregs (spills).
        @pl.loop(0, steps_here)
        def _(t):
            h = h_scratch[...]                             # (Bt, Hp) f32 carry
            gi_t = gi_scratch[t].astype(jnp.float32)       # (Bt, 3*Hp)
            w_hh = w_hh_ref[...]
            gh = jnp.dot(h.astype(w_hh.dtype), w_hh,
                         preferred_element_type=jnp.float32)

            # torch GRU gate order [reset, update, new]; slices 128-aligned.
            r = jax.nn.sigmoid(gi_t[:, :Hp] + gh[:, :Hp])
            z = jax.nn.sigmoid(gi_t[:, Hp:2 * Hp] + gh[:, Hp:2 * Hp])
            n = jnp.tanh(gi_t[:, 2 * Hp:] + r * (gh[:, 2 * Hp:] + b_hn))
            h_new = (1.0 - z) * n + z * h

            # pack_padded_sequence emulation: freeze h once t >= length[b].
            mask = (chunk_start + t) < lens
            h_scratch[...] = jnp.where(mask, h_new, h)

    # ---- fused final Linear, once per batch tile (lane-dense output) ----
    @pl.when(tc == pl.num_programs(1) - 1)
    def _():
        h_fin = h_scratch[...]
        w_fc = w_fc_ref[...]
        out_ref[...] = (jnp.dot(h_fin.astype(w_fc.dtype), w_fc,
                                preferred_element_type=jnp.float32)
                        + b_fc_ref[...])


def rnn_program_encoder_forward(token_ids, seq_lengths, params, h0,
                                compute_dtype=COMPUTE_DTYPE):
    """token_ids: (B, T) int32; seq_lengths: (B,) int32; h0: (B, H) f32.

    h0 rows pair with the length-sorted batch positions, exactly like the
    PyTorch module (which sorts the inputs but not h0)."""
    B, T = token_ids.shape
    E = params["w_ih_t"].shape[0]
    H = params["w_hh_t"].shape[0]
    O = params["w_fc_t"].shape[1]

    Ep = _round_up(E, LANE)
    Hp = _round_up(H, LANE)
    Op = _round_up(O, LANE)

    # Batch tiling: MXU-native M where the batch allows.
    # NOTE(v7x): if 8 < Bp <= 128 and both TensorCores matter more than MXU
    # fill, pick Bt = Bp // 2 so the "parallel" axis has >= 2 tiles.
    Bp0 = _round_up(B, SUBLANE)
    Bt = min(Bp0, B_TILE_MAX)
    Bp = _round_up(B, Bt)
    num_b_tiles = Bp // Bt

    cd_bytes = jnp.dtype(compute_dtype).itemsize
    gi_bytes = cd_bytes
    Tc = min(T, TC_MAX)
    while Tc > 8 and _vmem_estimate(Tc, Bt, Ep, Hp, Op, cd_bytes, gi_bytes) > VMEM_BUDGET:
        Tc = max(8, Tc // 2)
    T_pad = _round_up(T, Tc)
    num_t_chunks = T_pad // Tc

    vmem_est = _vmem_estimate(Tc, Bt, Ep, Hp, Op, cd_bytes, gi_bytes)
    vmem_limit = int(min(max(int(vmem_est * 1.5) + (2 << 20), 32 << 20), VMEM_CAP))

    # ---- reproduce the PyTorch sort / unsort (physically sorted batch) ----
    sorted_idx = jnp.argsort(-seq_lengths)
    reversed_idx = jnp.argsort(sorted_idx)
    tok_s = token_ids[sorted_idx]
    lens_s = seq_lengths.astype(jnp.int32)[sorted_idx]

    # ---- embedding gather, time-major, lane padded (plain-JAX glue) -------
    # TODO(synk): fuse the embedding row gather into the kernel (manual DMA
    # gather) if vocab*E HBM traffic ever dominates.
    emb_tbl = jnp.pad(params["embedding"].astype(compute_dtype),
                      ((0, 0), (0, Ep - E)))
    x = jnp.take(emb_tbl, tok_s.T, axis=0)                    # (T, B, Ep)
    x = jnp.pad(x, ((0, T_pad - T), (0, Bp - B), (0, 0)))     # (T_pad, Bp, Ep)
    # (num_b_tiles, T_pad, Bt, Ep): each grid step's x block is one contiguous DMA.
    x4 = x.reshape(T_pad, num_b_tiles, Bt, Ep).transpose(1, 0, 2, 3)

    # ---- gate-aligned weight padding: gate g occupies cols [g*Hp, g*Hp+H) --
    def pad_gates(w, in_dim, in_pad):
        w3 = w.reshape(in_dim, 3, H)
        w3 = jnp.pad(w3, ((0, in_pad - in_dim), (0, 0), (0, Hp - H)))
        return w3.reshape(in_pad, 3 * Hp)

    w_ih = pad_gates(params["w_ih_t"], E, Ep).astype(compute_dtype)
    w_hh = pad_gates(params["w_hh_t"], H, Hp).astype(compute_dtype)

    b_ih3 = params["b_ih"].reshape(3, H)
    b_hh3 = params["b_hh"].reshape(3, H)
    # r/z biases only ever appear summed; b_hn must stay inside the r*(.) term.
    b_gi3 = jnp.stack([b_ih3[0] + b_hh3[0], b_ih3[1] + b_hh3[1], b_ih3[2]])
    b_gi = jnp.pad(b_gi3, ((0, 0), (0, Hp - H))).reshape(1, 3 * Hp).astype(jnp.float32)
    b_hn = jnp.pad(b_hh3[2:3], ((0, 0), (0, Hp - H))).astype(jnp.float32)   # (1, Hp)

    w_fc = jnp.pad(params["w_fc_t"],
                   ((0, Hp - H), (0, Op - O))).astype(compute_dtype)
    b_fc = jnp.pad(params["b_fc"], ((0, 0), (0, Op - O))).astype(jnp.float32)

    h0_p = jnp.pad(h0.astype(jnp.float32), ((0, Bp - B), (0, Hp - H)))
    lens_p = jnp.pad(lens_s, (0, Bp - B)).reshape(Bp, 1)

    # Per-tile step bound: tiles holding only short sequences exit early.
    tile_steps = jnp.minimum(
        jnp.max(lens_p.reshape(num_b_tiles, Bt), axis=1), T).astype(jnp.int32)

    out = pl.pallas_call(
        gru_encoder_kernel,
        out_shape=jax.ShapeDtypeStruct((Bp, Op), jnp.float32),
        grid_spec=pltpu.PrefetchScalarGridSpec(
            num_scalar_prefetch=1,                        # per-tile steps -> SMEM
            grid=(num_b_tiles, num_t_chunks),
            in_specs=[
                pl.BlockSpec((None, Tc, Bt, Ep), lambda b, t, ts: (b, t, 0, 0)),  # x chunk
                pl.BlockSpec((Bt, 1), lambda b, t, ts: (b, 0)),        # lengths
                pl.BlockSpec((Bt, Hp), lambda b, t, ts: (b, 0)),       # h0
                pl.BlockSpec((Ep, 3 * Hp), lambda b, t, ts: (0, 0)),   # W_ih^T
                pl.BlockSpec((Hp, 3 * Hp), lambda b, t, ts: (0, 0)),   # W_hh^T
                pl.BlockSpec((1, 3 * Hp), lambda b, t, ts: (0, 0)),    # b_gi (f32)
                pl.BlockSpec((1, Hp), lambda b, t, ts: (0, 0)),        # b_hn (f32)
                pl.BlockSpec((Hp, Op), lambda b, t, ts: (0, 0)),       # W_fc^T
                pl.BlockSpec((1, Op), lambda b, t, ts: (0, 0)),        # b_fc (f32)
            ],
            out_specs=pl.BlockSpec((Bt, Op), lambda b, t, ts: (b, 0)),
            scratch_shapes=[
                pltpu.VMEM((Tc, Bt, 3 * Hp), compute_dtype),   # gi for one time chunk
                pltpu.VMEM((Bt, Hp), jnp.float32),             # hidden carry (f32)
            ]),
        compiler_params=pltpu.CompilerParams(
            dimension_semantics=("parallel", "arbitrary"),     # batch tiles || , time serial
            vmem_limit_bytes=vmem_limit),
    )(tile_steps, x4, lens_p, h0_p, w_ih, w_hh, b_gi, b_hn, w_fc, b_fc)

    # Unsort back to original sample order (matches torch's reversed_idx).
    return out[:B, :O][reversed_idx]


def _reference_forward(token_ids, seq_lengths, params, h0):
    """Pure-JAX reference (lax.scan GRU) for the correctness check."""
    B, T = token_ids.shape
    H = params["w_hh_t"].shape[0]
    emb = jnp.take(params["embedding"], token_ids, axis=0)      # (B, T, E)
    sorted_idx = jnp.argsort(-seq_lengths)
    reversed_idx = jnp.argsort(sorted_idx)
    h = h0[reversed_idx]

    def step(h, inp):
        x_t, t = inp
        gi = x_t @ params["w_ih_t"] + params["b_ih"]
        gh = h @ params["w_hh_t"] + params["b_hh"]
        r = jax.nn.sigmoid(gi[:, :H] + gh[:, :H])
        z = jax.nn.sigmoid(gi[:, H:2 * H] + gh[:, H:2 * H])
        n = jnp.tanh(gi[:, 2 * H:] + r * gh[:, 2 * H:])
        h_new = (1.0 - z) * n + z * h
        mask = (t < seq_lengths)[:, None]
        return jnp.where(mask, h_new, h), None

    x_tm = jnp.transpose(emb, (1, 0, 2))
    h_fin, _ = lax.scan(step, h, (x_tm, jnp.arange(T)))
    return h_fin @ params["w_fc_t"] + params["b_fc"]


def make_params(key, vocab_size, embedding_size, hidden_size, output_size):
    ks = jax.random.split(key, 8)
    E, H, O = embedding_size, hidden_size, output_size
    s_ih = 1.0 / jnp.sqrt(H)
    params = {
        "embedding": jax.random.normal(ks[0], (vocab_size, E), jnp.float32),
        # stored pre-transposed: (in, out), torch gate order r,z,n
        "w_ih_t": jax.random.uniform(ks[1], (E, 3 * H), jnp.float32, -s_ih, s_ih),
        "w_hh_t": jax.random.uniform(ks[2], (H, 3 * H), jnp.float32, -s_ih, s_ih),
        "b_ih": jax.random.uniform(ks[3], (1, 3 * H), jnp.float32, -s_ih, s_ih),
        "b_hh": jax.random.uniform(ks[4], (1, 3 * H), jnp.float32, -s_ih, s_ih),
        "w_fc_t": jax.random.uniform(ks[5], (H, O), jnp.float32, -s_ih, s_ih),
        "b_fc": jax.random.uniform(ks[6], (1, O), jnp.float32, -s_ih, s_ih),
    }
    return params, ks[7]


if __name__ == "__main__":
    VOCAB, E, H, O = 50, 32, 32, 16
    B, T = 2, 8

    key = jax.random.PRNGKey(0)
    params, key = make_params(key, VOCAB, E, H, O)

    k_tok, k_h0 = jax.random.split(key)
    token_ids = jax.random.randint(k_tok, (B, T), 0, VOCAB, dtype=jnp.int32)
    seq_lengths = jnp.array([5, 8], dtype=jnp.int32)
    # Deterministic stand-in for init_hidden's xavier_normal_ random state.
    h0 = jax.random.normal(k_h0, (B, H), jnp.float32) * (2.0 / (B + H)) ** 0.5

    ref = _reference_forward(token_ids, seq_lengths, params, h0)

    # f32 compute path: tight check against the pure-JAX f32 reference.
    out_f32 = jax.block_until_ready(
        rnn_program_encoder_forward(token_ids, seq_lengths, params, h0,
                                    compute_dtype=jnp.float32))
    assert out_f32.shape == (B, O)
    assert jnp.allclose(out_f32, ref, atol=1e-2, rtol=1e-2)

    # Default bf16 weights/x/gi path (per perf review); slightly looser
    # tolerance since the reference stays in f32.
    out_bf16 = jax.block_until_ready(
        rnn_program_encoder_forward(token_ids, seq_lengths, params, h0))
    assert out_bf16.shape == (B, O)
    assert jnp.allclose(out_bf16, ref, atol=2e-2, rtol=2e-2)

    print("KERNEL_OK")
</pallas_src>

<mosaic_0001>
module attributes {stable_mosaic.version = 11 : i64} {
  func.func @gru_encoder_kernel(%arg0: i32, %arg1: i32, %arg2: memref<1xi32, #tpu.memory_space<smem>>, %arg3: memref<1x8x8x128xf32, #tpu.memory_space<vmem>>, %arg4: memref<8x1xi32, #tpu.memory_space<vmem>>, %arg5: memref<8x128xf32, #tpu.memory_space<vmem>>, %arg6: memref<128x384xf32, #tpu.memory_space<vmem>>, %arg7: memref<128x384xf32, #tpu.memory_space<vmem>>, %arg8: memref<1x384xf32, #tpu.memory_space<vmem>>, %arg9: memref<1x128xf32, #tpu.memory_space<vmem>>, %arg10: memref<128x128xf32, #tpu.memory_space<vmem>>, %arg11: memref<1x128xf32, #tpu.memory_space<vmem>>, %arg12: memref<8x128xf32, #tpu.memory_space<vmem>>, %arg13: memref<8x8x384xf32, #tpu.memory_space<vmem>>, %arg14: memref<8x128xf32, #tpu.memory_space<vmem>>) attributes {dimension_semantics = [#tpu.dimension_semantics<parallel>, #tpu.dimension_semantics<arbitrary>], iteration_bounds = array<i64: 1, 1>, scalar_prefetch = 1 : i64, scratch_operands = 2 : i64, tpu.core_type = #tpu.core_type<tc>, window_params = [{transform_indices = @transform_0, window_bounds = array<i64: 1, 8, 8, 128>}, {transform_indices = @transform_1, window_bounds = array<i64: 8, 1>}, {transform_indices = @transform_2, window_bounds = array<i64: 8, 128>}, {pipeline_mode = #tpu.pipeline_mode<synchronous>, transform_indices = @transform_3, window_bounds = array<i64: 128, 384>}, {pipeline_mode = #tpu.pipeline_mode<synchronous>, transform_indices = @transform_4, window_bounds = array<i64: 128, 384>}, {pipeline_mode = #tpu.pipeline_mode<synchronous>, transform_indices = @transform_5, window_bounds = array<i64: 1, 384>}, {pipeline_mode = #tpu.pipeline_mode<synchronous>, transform_indices = @transform_6, window_bounds = array<i64: 1, 128>}, {pipeline_mode = #tpu.pipeline_mode<synchronous>, transform_indices = @transform_7, window_bounds = array<i64: 128, 128>}, {pipeline_mode = #tpu.pipeline_mode<synchronous>, transform_indices = @transform_8, window_bounds = array<i64: 1, 128>}, {transform_indices = @transform_9, window_bounds = array<i64: 8, 128>}]} {
    %c0_i32 = arith.constant 0 : i32
    %0 = arith.cmpi eq, %arg1, %c0_i32 : i32
    %1 = arith.extui %0 : i1 to i32
    %c0_i32_0 = arith.constant 0 : i32
    %2 = arith.cmpi ne, %1, %c0_i32_0 : i32
    scf.if %2 {
      %c0 = arith.constant 0 : index
      %c0_7 = arith.constant 0 : index
      %15 = vector.load %arg5[%c0, %c0_7] : memref<8x128xf32, #tpu.memory_space<vmem>>, vector<8x128xf32>
      %c0_8 = arith.constant 0 : index
      %c0_9 = arith.constant 0 : index
      %16 = vector.load %arg14[%c0_8, %c0_9] : memref<8x128xf32, #tpu.memory_space<vmem>>, vector<8x128xf32>
      tpu.vector_store %arg14[%c0_8, %c0_9], %15 {strides = array<i32>} : memref<8x128xf32, #tpu.memory_space<vmem>>, vector<8x128xf32>,
    } else {
    }
    %c8_i32 = arith.constant 8 : i32
    %3 = arith.muli %arg1, %c8_i32 : i32
    %4 = arith.index_cast %arg0 : i32 to index
    %5 = memref.load %arg2[%4] : memref<1xi32, #tpu.memory_space<smem>>
    %6 = arith.subi %5, %3 : i32
    %c0_i32_1 = arith.constant 0 : i32
    %c8_i32_2 = arith.constant 8 : i32
    %7 = arith.maxsi %c0_i32_1, %6 : i32
    %8 = arith.minsi %c8_i32_2, %7 : i32
    %c0_i32_3 = arith.constant 0 : i32
    %9 = arith.cmpi sgt, %8, %c0_i32_3 : i32
    %10 = arith.extui %9 : i1 to i32
    %c0_i32_4 = arith.constant 0 : i32
    %11 = arith.cmpi ne, %10, %c0_i32_4 : i32
    scf.if %11 {
      %c0 = arith.constant 0 : index
      %c0_7 = arith.constant 0 : index
      %c0_8 = arith.constant 0 : index
      %c0_9 = arith.constant 0 : index
      %15 = vector.load %arg3[%c0, %c0_7, %c0_8, %c0_9] : memref<1x8x8x128xf32, #tpu.memory_space<vmem>>, vector<1x8x8x128xf32>
      %16 = vector.shape_cast %15 : vector<1x8x8x128xf32> to vector<8x8x128xf32>
      %17 = vector.shape_cast %16 : vector<8x8x128xf32> to vector<64x128xf32>
      %c0_10 = arith.constant 0 : index
      %c0_11 = arith.constant 0 : index
      %18 = vector.load %arg6[%c0_10, %c0_11] : memref<128x384xf32, #tpu.memory_space<vmem>>, vector<128x384xf32>
      %cst = arith.constant dense<0.000000e+00> : vector<64x384xf32>
      %19 = tpu.matmul %17, %18, %cst {dimension_numbers = #tpu.dot_dimension_numbers<[1], [0], [0], [1], [0, 0, 1, 1], [], []>} : vector<64x128xf32>, vector<128x384xf32>, vector<64x384xf32> -> vector<64x384xf32>
      %c0_12 = arith.constant 0 : index
      %c0_13 = arith.constant 0 : index
      %20 = vector.load %arg8[%c0_12, %c0_13] : memref<1x384xf32, #tpu.memory_space<vmem>>, vector<1x384xf32>
      %21 = vector.broadcast %20 : vector<1x384xf32> to vector<64x384xf32>
      %22 = arith.addf %19, %21 : vector<64x384xf32>
      %23 = vector.shape_cast %22 : vector<64x384xf32> to vector<8x8x384xf32>
      %c0_14 = arith.constant 0 : index
      %c0_15 = arith.constant 0 : index
      %c0_16 = arith.constant 0 : index
      %24 = vector.load %arg13[%c0_14, %c0_15, %c0_16] : memref<8x8x384xf32, #tpu.memory_space<vmem>>, vector<8x8x384xf32>
      tpu.vector_store %arg13[%c0_14, %c0_15, %c0_16], %23 {strides = array<i32>} : memref<8x8x384xf32, #tpu.memory_space<vmem>>, vector<8x8x384xf32>,
      %c0_17 = arith.constant 0 : index
      %c0_18 = arith.constant 0 : index
      %25 = vector.load %arg4[%c0_17, %c0_18] : memref<8x1xi32, #tpu.memory_space<vmem>>, vector<8x1xi32>
      %c0_19 = arith.constant 0 : index
      %c0_20 = arith.constant 0 : index
      %26 = vector.load %arg9[%c0_19, %c0_20] : memref<1x128xf32, #tpu.memory_space<vmem>>, vector<1x128xf32>
      %27 = vector.shape_cast %26 : vector<1x128xf32> to vector<1x128xf32>
      %28 = vector.broadcast %27 : vector<1x128xf32> to vector<8x128xf32>
      %c0_i32_21 = arith.constant 0 : i32
      %29 = arith.subi %8, %c0_i32_21 : i32
      %c1_i32 = arith.constant 1 : i32
      %c1_i32_22 = arith.constant 1 : i32
      %30 = arith.subi %c1_i32, %c1_i32_22 : i32
      %31 = arith.addi %29, %30 : i32
      %c1_i32_23 = arith.constant 1 : i32
      %32 = arith.divsi %31, %c1_i32_23 : i32
      %c1_i32_24 = arith.constant 1 : i32
      %c0_i32_25 = arith.constant 0 : i32
      %c0_i32_26 = arith.constant 0 : i32
      %33 = arith.subi %32, %c0_i32_26 : i32
      %34 = arith.addi %c0_i32_26, %33 : i32
      %c1_i32_27 = arith.constant 1 : i32
      scf.for %arg15 = %c0_i32_26 to %34 step %c1_i32_27  : i32 {
        %35 = arith.muli %arg15, %c1_i32_24 : i32
        %36 = arith.addi %c0_i32_25, %35 : i32
        %c0_28 = arith.constant 0 : index
        %c0_29 = arith.constant 0 : index
        %37 = vector.load %arg14[%c0_28, %c0_29] : memref<8x128xf32, #tpu.memory_space<vmem>>, vector<8x128xf32>
        %38 = arith.index_cast %36 : i32 to index
        %c0_30 = arith.constant 0 : index
        %c0_31 = arith.constant 0 : index
        %39 = vector.load %arg13[%38, %c0_30, %c0_31] : memref<8x8x384xf32, #tpu.memory_space<vmem>>, vector<1x8x384xf32>
        %40 = vector.shape_cast %39 : vector<1x8x384xf32> to vector<8x384xf32>
        %c0_32 = arith.constant 0 : index
        %c0_33 = arith.constant 0 : index
        %41 = vector.load %arg7[%c0_32, %c0_33] : memref<128x384xf32, #tpu.memory_space<vmem>>, vector<128x384xf32>
        %cst_34 = arith.constant dense<0.000000e+00> : vector<8x384xf32>
        %42 = tpu.matmul %37, %41, %cst_34 {dimension_numbers = #tpu.dot_dimension_numbers<[1], [0], [0], [1], [0, 0, 1, 1], [], []>} : vector<8x128xf32>, vector<128x384xf32>, vector<8x384xf32> -> vector<8x384xf32>
        %43 = vector.extract_strided_slice %40 {offsets = [0, 0], sizes = [8, 128], strides = [1, 1]} : vector<8x384xf32> to vector<8x128xf32>
        %44 = vector.extract_strided_slice %42 {offsets = [0, 0], sizes = [8, 128], strides = [1, 1]} : vector<8x384xf32> to vector<8x128xf32>
        %45 = arith.addf %43, %44 : vector<8x128xf32>
        %46 = arith.negf %45 : vector<8x128xf32>
        %47 = math.exp %46 : vector<8x128xf32>
        %cst_35 = arith.constant 1.000000e+00 : f32
        %48 = vector.broadcast %cst_35 : f32 to vector<8x128xf32>
        %49 = arith.addf %48, %47 : vector<8x128xf32>
        %50 = arith.divf %48, %49 : vector<8x128xf32>
        %51 = vector.extract_strided_slice %40 {offsets = [0, 128], sizes = [8, 128], strides = [1, 1]} : vector<8x384xf32> to vector<8x128xf32>
        %52 = vector.extract_strided_slice %42 {offsets = [0, 128], sizes = [8, 128], strides = [1, 1]} : vector<8x384xf32> to vector<8x128xf32>
        %53 = arith.addf %51, %52 : vector<8x128xf32>
        %54 = arith.negf %53 : vector<8x128xf32>
        %55 = math.exp %54 : vector<8x128xf32>
        %cst_36 = arith.constant 1.000000e+00 : f32
        %56 = vector.broadcast %cst_36 : f32 to vector<8x128xf32>
        %57 = arith.addf %56, %55 : vector<8x128xf32>
        %58 = arith.divf %56, %57 : vector<8x128xf32>
        %59 = vector.extract_strided_slice %40 {offsets = [0, 256], sizes = [8, 128], strides = [1, 1]} : vector<8x384xf32> to vector<8x128xf32>
        %60 = vector.extract_strided_slice %42 {offsets = [0, 256], sizes = [8, 128], strides = [1, 1]} : vector<8x384xf32> to vector<8x128xf32>
        %61 = arith.addf %60, %28 : vector<8x128xf32>
        %62 = arith.mulf %50, %61 : vector<8x128xf32>
        %63 = arith.addf %59, %62 : vector<8x128xf32>
        %64 = math.tanh %63 : vector<8x128xf32>
        %cst_37 = arith.constant 1.000000e+00 : f32
        %65 = vector.broadcast %cst_37 : f32 to vector<8x128xf32>
        %66 = arith.subf %65, %58 : vector<8x128xf32>
        %67 = arith.mulf %66, %64 : vector<8x128xf32>
        %68 = arith.mulf %58, %37 : vector<8x128xf32>
        %69 = arith.addf %67, %68 : vector<8x128xf32>
        %70 = arith.addi %3, %36 : i32
        %71 = vector.broadcast %70 : i32 to vector<8x1xi32>
        %72 = arith.cmpi slt, %71, %25 : vector<8x1xi32>
        %73 = vector.shape_cast %72 : vector<8x1xi1> to vector<8x1xi1>
        %74 = vector.broadcast %73 : vector<8x1xi1> to vector<8x128xi1>
        %75 = arith.select %74, %69, %37 : vector<8x128xi1>, vector<8x128xf32>
        %c0_38 = arith.constant 0 : index
        %c0_39 = arith.constant 0 : index
        %76 = vector.load %arg14[%c0_38, %c0_39] : memref<8x128xf32, #tpu.memory_space<vmem>>, vector<8x128xf32>
        tpu.vector_store %arg14[%c0_38, %c0_39], %75 {strides = array<i32>} : memref<8x128xf32, #tpu.memory_space<vmem>>, vector<8x128xf32>,
      }
    } else {
    }
    %c0_i32_5 = arith.constant 0 : i32
    %12 = arith.cmpi eq, %arg1, %c0_i32_5 : i32
    %13 = arith.extui %12 : i1 to i32
    %c0_i32_6 = arith.constant 0 : i32
    %14 = arith.cmpi ne, %13, %c0_i32_6 : i32
    scf.if %14 {
      %c0 = arith.constant 0 : index
      %c0_7 = arith.constant 0 : index
      %15 = vector.load %arg14[%c0, %c0_7] : memref<8x128xf32, #tpu.memory_space<vmem>>, vector<8x128xf32>
      %c0_8 = arith.constant 0 : index
      %c0_9 = arith.constant 0 : index
      %16 = vector.load %arg10[%c0_8, %c0_9] : memref<128x128xf32, #tpu.memory_space<vmem>>, vector<128x128xf32>
      %cst = arith.constant dense<0.000000e+00> : vector<8x128xf32>
      %17 = tpu.matmul %15, %16, %cst {dimension_numbers = #tpu.dot_dimension_numbers<[1], [0], [0], [1], [0, 0, 1, 1], [], []>} : vector<8x128xf32>, vector<128x128xf32>, vector<8x128xf32> -> vector<8x128xf32>
      %c0_10 = arith.constant 0 : index
      %c0_11 = arith.constant 0 : index
      %18 = vector.load %arg11[%c0_10, %c0_11] : memref<1x128xf32, #tpu.memory_space<vmem>>, vector<1x128xf32>
      %19 = vector.broadcast %18 : vector<1x128xf32> to vector<8x128xf32>
      %20 = arith.addf %17, %19 : vector<8x128xf32>
      %c0_12 = arith.constant 0 : index
      %c0_13 = arith.constant 0 : index
      %21 = vector.load %arg12[%c0_12, %c0_13] : memref<8x128xf32, #tpu.memory_space<vmem>>, vector<8x128xf32>
      tpu.vector_store %arg12[%c0_12, %c0_13], %20 {strides = array<i32>} : memref<8x128xf32, #tpu.memory_space<vmem>>, vector<8x128xf32>,
    } else {
    }
    return
  }
  func.func @transform_0(%arg0: i32, %arg1: i32, %arg2: memref<1xi32, #tpu.memory_space<smem>>) -> (i32, i32, i32, i32) {
    %c0_i32 = arith.constant 0 : i32
    %c0_i32_0 = arith.constant 0 : i32
    %c0_i32_1 = arith.constant 0 : i32
    return %arg0, %arg1, %c0_i32, %c0_i32_0 : i32, i32, i32, i32
  }
  func.func @transform_1(%arg0: i32, %arg1: i32, %arg2: memref<1xi32, #tpu.memory_space<smem>>) -> (i32, i32) {
    %c0_i32 = arith.constant 0 : i32
    %c0_i32_0 = arith.constant 0 : i32
    return %arg0, %c0_i32 : i32, i32
  }
  func.func @transform_2(%arg0: i32, %arg1: i32, %arg2: memref<1xi32, #tpu.memory_space<smem>>) -> (i32, i32) {
    %c0_i32 = arith.constant 0 : i32
    %c0_i32_0 = arith.constant 0 : i32
    return %arg0, %c0_i32 : i32, i32
  }
  func.func @transform_3(%arg0: i32, %arg1: i32, %arg2: memref<1xi32, #tpu.memory_space<smem>>) -> (i32, i32) {
    %c0_i32 = arith.constant 0 : i32
    %c0_i32_0 = arith.constant 0 : i32
    %c0_i32_1 = arith.constant 0 : i32
    return %c0_i32, %c0_i32_0 : i32, i32
  }
  func.func @transform_4(%arg0: i32, %arg1: i32, %arg2: memref<1xi32, #tpu.memory_space<smem>>) -> (i32, i32) {
    %c0_i32 = arith.constant 0 : i32
    %c0_i32_0 = arith.constant 0 : i32
    %c0_i32_1 = arith.constant 0 : i32
    return %c0_i32, %c0_i32_0 : i32, i32
  }
  func.func @transform_5(%arg0: i32, %arg1: i32, %arg2: memref<1xi32, #tpu.memory_space<smem>>) -> (i32, i32) {
    %c0_i32 = arith.constant 0 : i32
    %c0_i32_0 = arith.constant 0 : i32
    %c0_i32_1 = arith.constant 0 : i32
    return %c0_i32, %c0_i32_0 : i32, i32
  }
  func.func @transform_6(%arg0: i32, %arg1: i32, %arg2: memref<1xi32, #tpu.memory_space<smem>>) -> (i32, i32) {
    %c0_i32 = arith.constant 0 : i32
    %c0_i32_0 = arith.constant 0 : i32
    %c0_i32_1 = arith.constant 0 : i32
    return %c0_i32, %c0_i32_0 : i32, i32
  }
  func.func @transform_7(%arg0: i32, %arg1: i32, %arg2: memref<1xi32, #tpu.memory_space<smem>>) -> (i32, i32) {
    %c0_i32 = arith.constant 0 : i32
    %c0_i32_0 = arith.constant 0 : i32
    %c0_i32_1 = arith.constant 0 : i32
    return %c0_i32, %c0_i32_0 : i32, i32
  }
  func.func @transform_8(%arg0: i32, %arg1: i32, %arg2: memref<1xi32, #tpu.memory_space<smem>>) -> (i32, i32) {
    %c0_i32 = arith.constant 0 : i32
    %c0_i32_0 = arith.constant 0 : i32
    %c0_i32_1 = arith.constant 0 : i32
    return %c0_i32, %c0_i32_0 : i32, i32
  }
  func.func @transform_9(%arg0: i32, %arg1: i32, %arg2: memref<1xi32, #tpu.memory_space<smem>>) -> (i32, i32) {
    %c0_i32 = arith.constant 0 : i32
    %c0_i32_0 = arith.constant 0 : i32
    return %arg0, %c0_i32 : i32, i32
  }
}

</mosaic_0001>

<llo_original>
// kernel: tpu_custom_call.1
$region0: #{tpu_custom_call.1}
  #allocation0 [shape = 'u32[]', space=smem, size = 0x4, offset = 0x4, fixed_abs, tag = 'smem constant byte address 0x4 - core index']
  #allocation1 [shape = 'u32[144,128]{1,0:T(1,128)}', space=vmem, size = 0x12000, scoped, tag = 'internal scratch']
  #allocation2 [shape = 'f32[8,8,384]{2,1,0:T(8,128)}', space=vmem, size = 0x18000, scoped, tag = 'scratch operand']
  #allocation3 [shape = 'f32[8,128]{1,0:T(8,128)}', space=vmem, size = 0x1000, scoped, tag = 'scratch operand']
  #allocation4 [shape = 's32[1]{0}', space=sflag, size = 0x4, scoped, tag = 'scoped memory for tpu_custom_call.1']
  #allocation5 [shape = 's32[1]{0:T(128)S(6)}', space=smem, size = 0x200, scoped, tag = 'prefetched SMEM operand 0']
  %s0 = inlined_call_operand.<no memory space> [shape: s32[1], index: 0, kind: input, shape index: {}]
  %s1 = inlined_call_operand.hbm [shape: f32[1,8,8,128], index: 1, kind: input, shape index: {}]
  %s2 = inlined_call_operand.vmem [shape: s32[8,1], index: 2, kind: input, shape index: {}]
  %s3 = inlined_call_operand.vmem [shape: f32[8,128], index: 3, kind: input, shape index: {}]
  %s4 = inlined_call_operand.hbm [shape: f32[128,384], index: 4, kind: input, shape index: {}]
  %s5 = inlined_call_operand.hbm [shape: f32[128,384], index: 5, kind: input, shape index: {}]
  %s6 = inlined_call_operand.vmem [shape: f32[1,384], index: 6, kind: input, shape index: {}]
  %s7 = inlined_call_operand.vmem [shape: f32[1,128], index: 7, kind: input, shape index: {}]
  %s8 = inlined_call_operand.hbm [shape: f32[128,128], index: 8, kind: input, shape index: {}]
  %s9 = inlined_call_operand.vmem [shape: f32[1,128], index: 9, kind: input, shape index: {}]
  %s10 = inlined_call_operand.hbm [shape: f32[8,128], index: 10, kind: output, shape index: {}]
  %s11 = sld [smem:[#allocation0]]
  $region81: #{tpu_custom_call.1} parent=0
    _
  %s13 = ssub.s32 1, %s11
  %s14 = scalar_select 0, %s13, %s11
  %15 = sst [smem:[#allocation5]] %s0
  $region1: #{tpu_custom_call.1} parent=0
    #allocation6 [shape = 'u8[32768]{0}', space=vmem, size = 0x8000, scoped, tag = 'input window, operand 1, single buffered']
    #allocation7 [shape = 's32[1]{0}', space=sflag, size = 0x4, scoped, tag = 'scoped memory for tpu_custom_call.1']
    #allocation8 [shape = 's32[1]{0}', space=sflag, size = 0x4, scoped, tag = 'scoped memory for tpu_custom_call.1']
    #allocation9 [shape = 'u8[196608]{0}', space=vmem, size = 0x30000, scoped, tag = 'input window, operand 4, single buffered']
    #allocation10 [shape = 's32[1]{0}', space=sflag, size = 0x4, scoped, tag = 'scoped memory for tpu_custom_call.1']
    #allocation11 [shape = 'u8[196608]{0}', space=vmem, size = 0x30000, scoped, tag = 'input window, operand 5, single buffered']
    #allocation12 [shape = 'u8[65536]{0}', space=vmem, size = 0x10000, scoped, tag = 'input window, operand 8, single buffered']
    #allocation13 [shape = 's32[1]{0}', space=sflag, size = 0x4, scoped, tag = 'scoped memory for tpu_custom_call.1']
    #allocation14 [shape = 'u8[4096]{0}', space=vmem, size = 0x1000, scoped, tag = 'output window, operand 0, single buffered']
    %16 = vsyncpa [#allocation7], 0
    %17 = vsyncpa [#allocation10], 0
    %18 = vsyncpa [#allocation13], 0
    %19 = vsyncpa [#allocation8], 0
    // Predicated region
    $region2: #{tpu_custom_call.1} parent=1 // pred_check
      _
    $region3: #{tpu_custom_call.1} parent=1 // pred_check_branch
      %21 = sbr.rel (0) target = $region5
    $region4: #{tpu_custom_call.1} parent=1 // pred_region
      %s23 = ssub.s32 1024, 1024
      %24 = vsyncadd [#allocation7], %s23
      %s25 = sshll.u32 [#allocation6], 4
      %s26 = int_to_ptr.vmem [resolvable:$true] %s25
      %31 = dma.hbm_to_vmem [thread:$0]  %s1, 1024, %s26, [#allocation7], 128, 128, 8
    $region5: #{tpu_custom_call.1} parent=1 // pred_fallthru
      _
    // Predicated region
    $region6: #{tpu_custom_call.1} parent=1 // pred_check
      _
    $region7: #{tpu_custom_call.1} parent=1 // pred_check_branch
      %33 = sbr.rel (0) target = $region9
    $region8: #{tpu_custom_call.1} parent=1 // pred_region
      _
    $region9: #{tpu_custom_call.1} parent=1 // pred_fallthru
      _
    // Predicated region
    $region10: #{tpu_custom_call.1} parent=1 // pred_check
      _
    $region11: #{tpu_custom_call.1} parent=1 // pred_check_branch
      %35 = sbr.rel (0) target = $region13
    $region12: #{tpu_custom_call.1} parent=1 // pred_region
      _
    $region13: #{tpu_custom_call.1} parent=1 // pred_fallthru
      _
    // Predicated region
    $region14: #{tpu_custom_call.1} parent=1 // pred_check
      _
    $region15: #{tpu_custom_call.1} parent=1 // pred_check_branch
      %37 = sbr.rel (0) target = $region17
    $region16: #{tpu_custom_call.1} parent=1 // pred_region
      %s39 = ssub.s32 6144, 6144
      %40 = vsyncadd [#allocation10], %s39
      %s41 = sshll.u32 [#allocation9], 4
      %s42 = int_to_ptr.vmem [resolvable:$true] %s41
      %47 = dma.hbm_to_vmem [thread:$0]  %s4, 6144, %s42, [#allocation10], 384, 384, 24
    $region17: #{tpu_custom_call.1} parent=1 // pred_fallthru
      _
    // Predicated region
    $region18: #{tpu_custom_call.1} parent=1 // pred_check
      _
    $region19: #{tpu_custom_call.1} parent=1 // pred_check_branch
      %49 = sbr.rel (0) target = $region21
    $region20: #{tpu_custom_call.1} parent=1 // pred_region
      %s51 = ssub.s32 6144, 6144
      %52 = vsyncadd [#allocation10], %s51
      %s53 = sshll.u32 [#allocation11], 4
      %s54 = int_to_ptr.vmem [resolvable:$true] %s53
      %59 = dma.hbm_to_vmem [thread:$0]  %s5, 6144, %s54, [#allocation10], 384, 384, 24
    $region21: #{tpu_custom_call.1} parent=1 // pred_fallthru
      _
    // Predicated region
    $region22: #{tpu_custom_call.1} parent=1 // pred_check
      _
    $region23: #{tpu_custom_call.1} parent=1 // pred_check_branch
      %61 = sbr.rel (0) target = $region25
    $region24: #{tpu_custom_call.1} parent=1 // pred_region
      _
    $region25: #{tpu_custom_call.1} parent=1 // pred_fallthru
      _
    // Predicated region
    $region26: #{tpu_custom_call.1} parent=1 // pred_check
      _
    $region27: #{tpu_custom_call.1} parent=1 // pred_check_branch
      %63 = sbr.rel (0) target = $region29
    $region28: #{tpu_custom_call.1} parent=1 // pred_region
      _
    $region29: #{tpu_custom_call.1} parent=1 // pred_fallthru
      _
    // Predicated region
    $region30: #{tpu_custom_call.1} parent=1 // pred_check
      _
    $region31: #{tpu_custom_call.1} parent=1 // pred_check_branch
      %65 = sbr.rel (0) target = $region33
    $region32: #{tpu_custom_call.1} parent=1 // pred_region
      %s67 = ssub.s32 2048, 2048
      %68 = vsyncadd [#allocation13], %s67
      %s69 = sshll.u32 [#allocation12], 4
      %s70 = int_to_ptr.vmem [resolvable:$true] %s69
      %75 = dma.hbm_to_vmem [thread:$0]  %s8, 2048, %s70, [#allocation13], 128, 128, 8
    $region33: #{tpu_custom_call.1} parent=1 // pred_fallthru
      _
    // Predicated region
    $region34: #{tpu_custom_call.1} parent=1 // pred_check
      _
    $region35: #{tpu_custom_call.1} parent=1 // pred_check_branch
      %77 = sbr.rel (0) target = $region37
    $region36: #{tpu_custom_call.1} parent=1 // pred_region
      _
    $region37: #{tpu_custom_call.1} parent=1 // pred_fallthru
      _
    // Predicated region
    $region38: #{tpu_custom_call.1} parent=1 // pred_check
      _
    $region39: #{tpu_custom_call.1} parent=1 // pred_check_branch
      %79 = sbr.rel (0) target = $region41
    $region40: #{tpu_custom_call.1} parent=1 // pred_region
      %80 = dma.done [#allocation7], 1024
    $region41: #{tpu_custom_call.1} parent=1 // pred_fallthru
      _
    // Predicated region
    $region42: #{tpu_custom_call.1} parent=1 // pred_check
      _
    $region43: #{tpu_custom_call.1} parent=1 // pred_check_branch
      %82 = sbr.rel (0) target = $region45
    $region44: #{tpu_custom_call.1} parent=1 // pred_region
      %83 = dma.done [#allocation10], 6144
    $region45: #{tpu_custom_call.1} parent=1 // pred_fallthru
      _
    // Predicated region
    $region46: #{tpu_custom_call.1} parent=1 // pred_check
      _
    $region47: #{tpu_custom_call.1} parent=1 // pred_check_branch
      %85 = sbr.rel (0) target = $region49
    $region48: #{tpu_custom_call.1} parent=1 // pred_region
      %86 = dma.done [#allocation10], 6144
    $region49: #{tpu_custom_call.1} parent=1 // pred_fallthru
      _
    // Predicated region
    $region50: #{tpu_custom_call.1} parent=1 // pred_check
      _
    $region51: #{tpu_custom_call.1} parent=1 // pred_check_branch
      %88 = sbr.rel (0) target = $region53
    $region52: #{tpu_custom_call.1} parent=1 // pred_region
      %89 = dma.done [#allocation13], 2048
    $region53: #{tpu_custom_call.1} parent=1 // pred_fallthru
      _
    %p90 = scmp.eq.s32.totalorder 0, 0
    // Predicated region
    $region54: #{tpu_custom_call.1} parent=1 // pred_check
      %p91 = pneg %p90
    $region55: #{tpu_custom_call.1} parent=1 // pred_check_branch
      %93 = sbr.rel (%p91) target = $region57
    $region56: #{tpu_custom_call.1} parent=1 // pred_region
      %v94 = vld [vmem:[%s3] sm:$0xff]
      %95 = vst [vmem:[#allocation3] sm:$0xff] %v94
    $region57: #{tpu_custom_call.1} parent=1 // pred_fallthru
      _
    %s96 = smul.u32 0, 8
    %s97 = sld [smem:[#allocation5]]
    %s98 = ssub.s32 %s97, %s96
    %p99 = scmp.gt.s32.totalorder %s98, 0
    %s100 = scalar_select %p99, %s98, 0
    %p101 = scmp.lt.s32.totalorder %s100, 8
    %s102 = scalar_select %p101, %s100, 8
    %p103 = scmp.gt.s32.totalorder %s102, 0
    // Predicated region
    $region58: #{tpu_custom_call.1} parent=1 // pred_check
      %p104 = pneg %p103
    $region59: #{tpu_custom_call.1} parent=1 // pred_check_branch
      %106 = sbr.rel (%p104) target = $region61
    $region60: #{tpu_custom_call.1} parent=1 // pred_region
      %v107 = vld [vmem:[#allocation6] sm:$0xff]
      %v108 = vld [vmem:[#allocation6 + $0x8] sm:$0xff]
      %v109 = vld [vmem:[#allocation6 + $0x10] sm:$0xff]
      %v110 = vld [vmem:[#allocation6 + $0x18] sm:$0xff]
      %v111 = vld [vmem:[#allocation6 + $0x20] sm:$0xff]
      %v112 = vld [vmem:[#allocation6 + $0x28] sm:$0xff]
      %v113 = vld [vmem:[#allocation6 + $0x30] sm:$0xff]
      %v114 = vld [vmem:[#allocation6 + $0x38] sm:$0xff]
      %v115 = vld [vmem:[#allocation9] sm:$0xff]
      %v116 = vld [vmem:[#allocation9 + $0x8] sm:$0xff]
      %v117 = vld [vmem:[#allocation9 + $0x10] sm:$0xff]
      %v118 = vld [vmem:[#allocation9 + $0x18] sm:$0xff]
      %v119 = vld [vmem:[#allocation9 + $0x20] sm:$0xff]
      %v120 = vld [vmem:[#allocation9 + $0x28] sm:$0xff]
      %v121 = vld [vmem:[#allocation9 + $0x30] sm:$0xff]
      %v122 = vld [vmem:[#allocation9 + $0x38] sm:$0xff]
      %v123 = vld [vmem:[#allocation9 + $0x40] sm:$0xff]
      %v124 = vld [vmem:[#allocation9 + $0x48] sm:$0xff]
      %v125 = vld [vmem:[#allocation9 + $0x50] sm:$0xff]
      %v126 = vld [vmem:[#allocation9 + $0x58] sm:$0xff]
      %v127 = vld [vmem:[#allocation9 + $0x60] sm:$0xff]
      %v128 = vld [vmem:[#allocation9 + $0x68] sm:$0xff]
      %v129 = vld [vmem:[#allocation9 + $0x70] sm:$0xff]
      %v130 = vld [vmem:[#allocation9 + $0x78] sm:$0xff]
      %v131 = vld [vmem:[#allocation9 + $0x80] sm:$0xff]
      %v132 = vld [vmem:[#allocation9 + $0x88] sm:$0xff]
      %v133 = vld [vmem:[#allocation9 + $0x90] sm:$0xff]
      %v134 = vld [vmem:[#allocation9 + $0x98] sm:$0xff]
      %v135 = vld [vmem:[#allocation9 + $0xa0] sm:$0xff]
      %v136 = vld [vmem:[#allocation9 + $0xa8] sm:$0xff]
      %v137 = vld [vmem:[#allocation9 + $0xb0] sm:$0xff]
      %v138 = vld [vmem:[#allocation9 + $0xb8] sm:$0xff]
      %v139 = vld [vmem:[#allocation9 + $0xc0] sm:$0xff]
      %v140 = vld [vmem:[#allocation9 + $0xc8] sm:$0xff]
      %v141 = vld [vmem:[#allocation9 + $0xd0] sm:$0xff]
      %v142 = vld [vmem:[#allocation9 + $0xd8] sm:$0xff]
      %v143 = vld [vmem:[#allocation9 + $0xe0] sm:$0xff]
      %v144 = vld [vmem:[#allocation9 + $0xe8] sm:$0xff]
      %v145 = vld [vmem:[#allocation9 + $0xf0] sm:$0xff]
      %v146 = vld [vmem:[#allocation9 + $0xf8] sm:$0xff]
      %v147 = vld [vmem:[#allocation9 + $0x100] sm:$0xff]
      %v148 = vld [vmem:[#allocation9 + $0x108] sm:$0xff]
      %v149 = vld [vmem:[#allocation9 + $0x110] sm:$0xff]
      %v150 = vld [vmem:[#allocation9 + $0x118] sm:$0xff]
      %v151 = vld [vmem:[#allocation9 + $0x120] sm:$0xff]
      %v152 = vld [vmem:[#allocation9 + $0x128] sm:$0xff]
      %v153 = vld [vmem:[#allocation9 + $0x130] sm:$0xff]
      %v154 = vld [vmem:[#allocation9 + $0x138] sm:$0xff]
      %v155 = vld [vmem:[#allocation9 + $0x140] sm:$0xff]
      %v156 = vld [vmem:[#allocation9 + $0x148] sm:$0xff]
      %v157 = vld [vmem:[#allocation9 + $0x150] sm:$0xff]
      %v158 = vld [vmem:[#allocation9 + $0x158] sm:$0xff]
      %v159 = vld [vmem:[#allocation9 + $0x160] sm:$0xff]
      %v160 = vld [vmem:[#allocation9 + $0x168] sm:$0xff]
      %v161 = vld [vmem:[#allocation9 + $0x170] sm:$0xff]
      %v162 = vld [vmem:[#allocation9 + $0x178] sm:$0xff]
      %v163 = vld [vmem:[%s6] sm:$0x7]
      %v165 = vlaneseq
      %v166 = vshrl.u32 %v165, 7
      %v167 = vsub.s32 0, %v166
      %v168 = vrot.slane %v163, %v167
      %v169 = vlaneseq
      %v170 = vshrl.u32 %v169, 7
      %v171 = vsub.s32 1, %v170
      %v172 = vrot.slane %v163, %v171
      %v173 = vlaneseq
      %v174 = vshrl.u32 %v173, 7
      %v175 = vsub.s32 2, %v174
      %v176 = vrot.slane %v163, %v175
      %180 = vmatprep.subr.mxu0 %v116
      %181 = vmatpush1.msra.mxu0 %v115
      %182 = vmatprep.subr.mxu0 %v119
      %183 = vmatpush1.msra.mxu0 %v118
      %184 = vmatprep.subr.mxu0 %v122
      %185 = vmatpush1.msra.mxu0 %v121
      %186 = vmatprep.subr.mxu0 %v125
      %187 = vmatpush1.msra.mxu0 %v124
      %188 = vmatprep.subr.mxu0 %v128
      %189 = vmatpush1.msra.mxu0 %v127
      %190 = vmatprep.subr.mxu0 %v131
      %191 = vmatpush1.msra.mxu0 %v130
      %192 = vmatprep.subr.mxu0 %v134
      %193 = vmatpush1.msra.mxu0 %v133
      %194 = vmatprep.subr.mxu0 %v137
      %195 = vmatpush1.msra.mxu0 %v136
      %196 = vmatprep.subr.mxu0 %v140
      %197 = vmatpush1.msra.mxu0 %v139
      %198 = vmatprep.subr.mxu0 %v143
      %199 = vmatpush1.msra.mxu0 %v142
      %200 = vmatprep.subr.mxu0 %v146
      %201 = vmatpush1.msra.mxu0 %v145
      %202 = vmatprep.subr.mxu0 %v149
      %203 = vmatpush1.msra.mxu0 %v148
      %204 = vmatprep.subr.mxu0 %v152
      %205 = vmatpush1.msra.mxu0 %v151
      %206 = vmatprep.subr.mxu0 %v155
      %207 = vmatpush1.msra.mxu0 %v154
      %208 = vmatprep.subr.mxu0 %v158
      %209 = vmatpush1.msra.mxu0 %v157
      %210 = vmatprep.subr.mxu0 %v161
      %211 = vmatpush1.msra.mxu0 %v160
      %212 = vmatprep.subr.mxu0 0.0
      %213 = vmatpush1.msra.mxu0 0.0
      %214 = vmatprep.subr.mxu0 0.0
      %215 = vmatpush1.msra.mxu0 0.0
      %216 = vmatprep.subr.mxu0 0.0
      %217 = vmatpush1.msra.mxu0 0.0
      %218 = vmatprep.subr.mxu0 0.0
      %219 = vmatpush1.msra.mxu0 0.0
      %220 = vmatprep.subr.mxu0 0.0
      %221 = vmatpush1.msra.mxu0 0.0
      %222 = vmatprep.subr.mxu0 0.0
      %223 = vmatpush1.msra.mxu0 0.0
      %224 = vmatprep.subr.mxu0 0.0
      %225 = vmatpush1.msra.mxu0 0.0
      %226 = vmatprep.subr.mxu0 0.0
      %227 = vmatpush1.msra.mxu0 0.0
      %228 = vmatprep.subr.mxu0 0.0
      %229 = vmatpush1.msra.mxu0 0.0
      %230 = vmatprep.subr.mxu0 0.0
      %231 = vmatpush1.msra.mxu0 0.0
      %232 = vmatprep.subr.mxu0 0.0
      %233 = vmatpush1.msra.mxu0 0.0
      %234 = vmatprep.subr.mxu0 0.0
      %235 = vmatpush1.msra.mxu0 0.0
      %236 = vmatprep.subr.mxu0 0.0
      %237 = vmatpush1.msra.mxu0 0.0
      %238 = vmatprep.subr.mxu0 0.0
      %239 = vmatpush1.msra.mxu0 0.0
      %240 = vmatprep.subr.mxu0 0.0
      %241 = vmatpush1.msra.mxu0 0.0
      %242 = vmatprep.subr.mxu0 0.0
      %243 = vmatpush1.msra.mxu0 0.0
      %244 = vmatprep.mubr.f32.mxu0 0.0
      %245 = vmatmul.mubr.f32.gmra.mrb[0].mxu0 %v107
      %v246 = vpop.f32.mrb[0].mxu0
      %v247 = vadd.f32 %v168, %v246
      %v248 = vpop.f32.mrb[0].mxu0
      %v249 = vadd.f32 %v172, %v248
      %250 = vmatprep.mubr.f32.mxu0 0.0
      %251 = vmatmul.mubr.f32.gmra.mrb[0].mxu0 %v108
      %v252 = vpop.f32.mrb[0].mxu0
      %v253 = vadd.f32 %v168, %v252
      %v254 = vpop.f32.mrb[0].mxu0
      %v255 = vadd.f32 %v172, %v254
      %256 = vmatprep.mubr.f32.mxu0 0.0
      %257 = vmatmul.mubr.f32.gmra.mrb[0].mxu0 %v109
      %v258 = vpop.f32.mrb[0].mxu0
      %v259 = vadd.f32 %v168, %v258
      %v260 = vpop.f32.mrb[0].mxu0
      %v261 = vadd.f32 %v172, %v260
      %262 = vmatprep.mubr.f32.mxu0 0.0
      %263 = vmatmul.mubr.f32.gmra.mrb[0].mxu0 %v110
      %v264 = vpop.f32.mrb[0].mxu0
      %v265 = vadd.f32 %v168, %v264
      %v266 = vpop.f32.mrb[0].mxu0
      %v267 = vadd.f32 %v172, %v266
      %268 = vmatprep.mubr.f32.mxu0 0.0
      %269 = vmatmul.mubr.f32.gmra.mrb[0].mxu0 %v111
      %v270 = vpop.f32.mrb[0].mxu0
      %v271 = vadd.f32 %v168, %v270
      %v272 = vpop.f32.mrb[0].mxu0
      %v273 = vadd.f32 %v172, %v272
      %274 = vmatprep.mubr.f32.mxu0 0.0
      %275 = vmatmul.mubr.f32.gmra.mrb[0].mxu0 %v112
      %v276 = vpop.f32.mrb[0].mxu0
      %v277 = vadd.f32 %v168, %v276
      %v278 = vpop.f32.mrb[0].mxu0
      %v279 = vadd.f32 %v172, %v278
      %280 = vmatprep.mubr.f32.mxu0 0.0
      %281 = vmatmul.mubr.f32.gmra.mrb[0].mxu0 %v113
      %v282 = vpop.f32.mrb[0].mxu0
      %v283 = vadd.f32 %v168, %v282
      %v284 = vpop.f32.mrb[0].mxu0
      %v285 = vadd.f32 %v172, %v284
      %286 = vmatprep.mubr.f32.mxu0 0.0
      %287 = vmatmul.mubr.f32.gmra.mrb[0].mxu0 %v114
      %v288 = vpop.f32.mrb[0].mxu0
      %v289 = vadd.f32 %v168, %v288
      %v290 = vpop.f32.mrb[0].mxu0
      %v291 = vadd.f32 %v172, %v290
      %292 = vdwg.mxu0
      %293 = vmatprep.subr.mxu0 0.0
      %294 = vmatpush1.msra.mxu0 %v117
      %295 = vmatprep.subr.mxu0 0.0
      %296 = vmatpush1.msra.mxu0 %v120
      %297 = vmatprep.subr.mxu0 0.0
      %298 = vmatpush1.msra.mxu0 %v123
      %299 = vmatprep.subr.mxu0 0.0
      %300 = vmatpush1.msra.mxu0 %v126
      %301 = vmatprep.subr.mxu0 0.0
      %302 = vmatpush1.msra.mxu0 %v129
      %303 = vmatprep.subr.mxu0 0.0
      %304 = vmatpush1.msra.mxu0 %v132
      %305 = vmatprep.subr.mxu0 0.0
      %306 = vmatpush1.msra.mxu0 %v135
      %307 = vmatprep.subr.mxu0 0.0
      %308 = vmatpush1.msra.mxu0 %v138
      %309 = vmatprep.subr.mxu0 0.0
      %310 = vmatpush1.msra.mxu0 %v141
      %311 = vmatprep.subr.mxu0 0.0
      %312 = vmatpush1.msra.mxu0 %v144
      %313 = vmatprep.subr.mxu0 0.0
      %314 = vmatpush1.msra.mxu0 %v147
      %315 = vmatprep.subr.mxu0 0.0
      %316 = vmatpush1.msra.mxu0 %v150
      %317 = vmatprep.subr.mxu0 0.0
      %318 = vmatpush1.msra.mxu0 %v153
      %319 = vmatprep.subr.mxu0 0.0
      %320 = vmatpush1.msra.mxu0 %v156
      %321 = vmatprep.subr.mxu0 0.0
      %322 = vmatpush1.msra.mxu0 %v159
      %323 = vmatprep.subr.mxu0 0.0
      %324 = vmatpush1.msra.mxu0 %v162
      %325 = vmatprep.subr.mxu0 0.0
      %326 = vmatpush1.msra.mxu0 0.0
      %327 = vmatprep.subr.mxu0 0.0
      %328 = vmatpush1.msra.mxu0 0.0
      %329 = vmatprep.subr.mxu0 0.0
      %330 = vmatpush1.msra.mxu0 0.0
      %331 = vmatprep.subr.mxu0 0.0
      %332 = vmatpush1.msra.mxu0 0.0
      %333 = vmatprep.subr.mxu0 0.0
      %334 = vmatpush1.msra.mxu0 0.0
      %335 = vmatprep.subr.mxu0 0.0
      %336 = vmatpush1.msra.mxu0 0.0
      %337 = vmatprep.subr.mxu0 0.0
      %338 = vmatpush1.msra.mxu0 0.0
      %339 = vmatprep.subr.mxu0 0.0
      %340 = vmatpush1.msra.mxu0 0.0
      %341 = vmatprep.subr.mxu0 0.0
      %342 = vmatpush1.msra.mxu0 0.0
      %343 = vmatprep.subr.mxu0 0.0
      %344 = vmatpush1.msra.mxu0 0.0
      %345 = vmatprep.subr.mxu0 0.0
      %346 = vmatpush1.msra.mxu0 0.0
      %347 = vmatprep.subr.mxu0 0.0
      %348 = vmatpush1.msra.mxu0 0.0
      %349 = vmatprep.subr.mxu0 0.0
      %350 = vmatpush1.msra.mxu0 0.0
      %351 = vmatprep.subr.mxu0 0.0
      %352 = vmatpush1.msra.mxu0 0.0
      %353 = vmatprep.subr.mxu0 0.0
      %354 = vmatpush1.msra.mxu0 0.0
      %355 = vmatprep.subr.mxu0 0.0
      %356 = vmatpush1.msra.mxu0 0.0
      %357 = vmatprep.mubr.f32.mxu0 0.0
      %358 = vmatmul.mubr.f32.gmra.mrb[0].mxu0 %v107
      %v359 = vpop.f32.mrb[0].mxu0
      %v360 = vadd.f32 %v176, %v359
      %v361 = vpop.f32.mrb[0].mxu0
      %362 = vmatprep.mubr.f32.mxu0 0.0
      %363 = vmatmul.mubr.f32.gmra.mrb[0].mxu0 %v108
      %v364 = vpop.f32.mrb[0].mxu0
      %v365 = vadd.f32 %v176, %v364
      %v366 = vpop.f32.mrb[0].mxu0
      %367 = vmatprep.mubr.f32.mxu0 0.0
      %368 = vmatmul.mubr.f32.gmra.mrb[0].mxu0 %v109
      %v369 = vpop.f32.mrb[0].mxu0
      %v370 = vadd.f32 %v176, %v369
      %v371 = vpop.f32.mrb[0].mxu0
      %372 = vmatprep.mubr.f32.mxu0 0.0
      %373 = vmatmul.mubr.f32.gmra.mrb[0].mxu0 %v110
      %v374 = vpop.f32.mrb[0].mxu0
      %v375 = vadd.f32 %v176, %v374
      %v376 = vpop.f32.mrb[0].mxu0
      %377 = vmatprep.mubr.f32.mxu0 0.0
      %378 = vmatmul.mubr.f32.gmra.mrb[0].mxu0 %v111
      %v379 = vpop.f32.mrb[0].mxu0
      %v380 = vadd.f32 %v176, %v379
      %v381 = vpop.f32.mrb[0].mxu0
      %382 = vmatprep.mubr.f32.mxu0 0.0
      %383 = vmatmul.mubr.f32.gmra.mrb[0].mxu0 %v112
      %v384 = vpop.f32.mrb[0].mxu0
      %v385 = vadd.f32 %v176, %v384
      %v386 = vpop.f32.mrb[0].mxu0
      %387 = vmatprep.mubr.f32.mxu0 0.0
      %388 = vmatmul.mubr.f32.gmra.mrb[0].mxu0 %v113
      %v389 = vpop.f32.mrb[0].mxu0
      %v390 = vadd.f32 %v176, %v389
      %v391 = vpop.f32.mrb[0].mxu0
      %392 = vmatprep.mubr.f32.mxu0 0.0
      %393 = vmatmul.mubr.f32.gmra.mrb[0].mxu0 %v114
      %v394 = vpop.f32.mrb[0].mxu0
      %v395 = vadd.f32 %v176, %v394
      %v396 = vpop.f32.mrb[0].mxu0
      %397 = vdwg.mxu0
      %398 = vst [vmem:[#allocation2] sm:$0xff] %v247
      %399 = vst [vmem:[#allocation2 + $0x8] sm:$0xff] %v249
      %400 = vst [vmem:[#allocation2 + $0x10] sm:$0xff] %v360
      %401 = vst [vmem:[#allocation2 + $0x18] sm:$0xff] %v253
      %402 = vst [vmem:[#allocation2 + $0x20] sm:$0xff] %v255
      %403 = vst [vmem:[#allocation2 + $0x28] sm:$0xff] %v365
      %404 = vst [vmem:[#allocation2 + $0x30] sm:$0xff] %v259
      %405 = vst [vmem:[#allocation2 + $0x38] sm:$0xff] %v261
      %406 = vst [vmem:[#allocation2 + $0x40] sm:$0xff] %v370
      %407 = vst [vmem:[#allocation2 + $0x48] sm:$0xff] %v265
      %408 = vst [vmem:[#allocation2 + $0x50] sm:$0xff] %v267
      %409 = vst [vmem:[#allocation2 + $0x58] sm:$0xff] %v375
      %410 = vst [vmem:[#allocation2 + $0x60] sm:$0xff] %v271
      %411 = vst [vmem:[#allocation2 + $0x68] sm:$0xff] %v273
      %412 = vst [vmem:[#allocation2 + $0x70] sm:$0xff] %v380
      %413 = vst [vmem:[#allocation2 + $0x78] sm:$0xff] %v277
      %414 = vst [vmem:[#allocation2 + $0x80] sm:$0xff] %v279
      %415 = vst [vmem:[#allocation2 + $0x88] sm:$0xff] %v385
      %416 = vst [vmem:[#allocation2 + $0x90] sm:$0xff] %v283
      %417 = vst [vmem:[#allocation2 + $0x98] sm:$0xff] %v285
      %418 = vst [vmem:[#allocation2 + $0xa0] sm:$0xff] %v390
      %419 = vst [vmem:[#allocation2 + $0xa8] sm:$0xff] %v289
      %420 = vst [vmem:[#allocation2 + $0xb0] sm:$0xff] %v291
      %421 = vst [vmem:[#allocation2 + $0xb8] sm:$0xff] %v395
      %v422 = vld [vmem:[%s2] sm:$0xff]
      %v423 = vld [vmem:[%s7] sm:$0x1]
      %v425 = vlaneseq
      %v426 = vshrl.u32 %v425, 7
      %v427 = vsub.s32 0, %v426
      %v428 = vrot.slane %v423, %v427
      // While loop
      $region62: #{tpu_custom_call.1} parent=60 // loop_pre_header
        _
      $region63: #{tpu_custom_call.1} parent=60 // loop_header
        %s431 = sphi 0, %s433
        %p432 = scmp.ge.s32.totalorder %s431, %s102
      $region64: #{tpu_custom_call.1} parent=60 // loop_header_branch
        %435 = sbr.rel (%p432) target = $region68
      $region65: #{tpu_custom_call.1} parent=60 // loop_body
        %v436 = vld [vmem:[#allocation3] sm:$0xff]
        %s437 = smul.u32 %s431, 3
        %s438 = smul.addr %s437, 8
        %s439 = scalar_lea.vmem [#allocation2], %s438
        %v440 = vld [vmem:[%s439] sm:$0xff]
        %v441 = vld [vmem:[%s439 + $0x8] sm:$0xff]
        %v442 = vld [vmem:[%s439 + $0x10] sm:$0xff]
        %v443 = vld [vmem:[#allocation11] sm:$0xff]
        %v444 = vld [vmem:[#allocation11 + $0x8] sm:$0xff]
        %v445 = vld [vmem:[#allocation11 + $0x10] sm:$0xff]
        %v446 = vld [vmem:[#allocation11 + $0x18] sm:$0xff]
        %v447 = vld [vmem:[#allocation11 + $0x20] sm:$0xff]
        %v448 = vld [vmem:[#allocation11 + $0x28] sm:$0xff]
        %v449 = vld [vmem:[#allocation11 + $0x30] sm:$0xff]
        %v450 = vld [vmem:[#allocation11 + $0x38] sm:$0xff]
        %v451 = vld [vmem:[#allocation11 + $0x40] sm:$0xff]
        %v452 = vld [vmem:[#allocation11 + $0x48] sm:$0xff]
        %v453 = vld [vmem:[#allocation11 + $0x50] sm:$0xff]
        %v454 = vld [vmem:[#allocation11 + $0x58] sm:$0xff]
        %v455 = vld [vmem:[#allocation11 + $0x60] sm:$0xff]
        %v456 = vld [vmem:[#allocation11 + $0x68] sm:$0xff]
        %v457 = vld [vmem:[#allocation11 + $0x70] sm:$0xff]
        %v458 = vld [vmem:[#allocation11 + $0x78] sm:$0xff]
        %v459 = vld [vmem:[#allocation11 + $0x80] sm:$0xff]
        %v460 = vld [vmem:[#allocation11 + $0x88] sm:$0xff]
        %v461 = vld [vmem:[#allocation11 + $0x90] sm:$0xff]
        %v462 = vld [vmem:[#allocation11 + $0x98] sm:$0xff]
        %v463 = vld [vmem:[#allocation11 + $0xa0] sm:$0xff]
        %v464 = vld [vmem:[#allocation11 + $0xa8] sm:$0xff]
        %v465 = vld [vmem:[#allocation11 + $0xb0] sm:$0xff]
        %v466 = vld [vmem:[#allocation11 + $0xb8] sm:$0xff]
        %v467 = vld [vmem:[#allocation11 + $0xc0] sm:$0xff]
        %v468 = vld [vmem:[#allocation11 + $0xc8] sm:$0xff]
        %v469 = vld [vmem:[#allocation11 + $0xd0] sm:$0xff]
        %v470 = vld [vmem:[#allocation11 + $0xd8] sm:$0xff]
        %v471 = vld [vmem:[#allocation11 + $0xe0] sm:$0xff]
        %v472 = vld [vmem:[#allocation11 + $0xe8] sm:$0xff]
        %v473 = vld [vmem:[#allocation11 + $0xf0] sm:$0xff]
        %v474 = vld [vmem:[#allocation11 + $0xf8] sm:$0xff]
        %v475 = vld [vmem:[#allocation11 + $0x100] sm:$0xff]
        %v476 = vld [vmem:[#allocation11 + $0x108] sm:$0xff]
        %v477 = vld [vmem:[#allocation11 + $0x110] sm:$0xff]
        %v478 = vld [vmem:[#allocation11 + $0x118] sm:$0xff]
        %v479 = vld [vmem:[#allocation11 + $0x120] sm:$0xff]
        %v480 = vld [vmem:[#allocation11 + $0x128] sm:$0xff]
        %v481 = vld [vmem:[#allocation11 + $0x130] sm:$0xff]
        %v482 = vld [vmem:[#allocation11 + $0x138] sm:$0xff]
        %v483 = vld [vmem:[#allocation11 + $0x140] sm:$0xff]
        %v484 = vld [vmem:[#allocation11 + $0x148] sm:$0xff]
        %v485 = vld [vmem:[#allocation11 + $0x150] sm:$0xff]
        %v486 = vld [vmem:[#allocation11 + $0x158] sm:$0xff]
        %v487 = vld [vmem:[#allocation11 + $0x160] sm:$0xff]
        %v488 = vld [vmem:[#allocation11 + $0x168] sm:$0xff]
        %v489 = vld [vmem:[#allocation11 + $0x170] sm:$0xff]
        %v490 = vld [vmem:[#allocation11 + $0x178] sm:$0xff]
        %491 = vmatprep.subr.mxu0 %v444
        %492 = vmatpush1.msra.mxu0 %v443
        %493 = vmatprep.subr.mxu0 %v447
        %494 = vmatpush1.msra.mxu0 %v446
        %495 = vmatprep.subr.mxu0 %v450
        %496 = vmatpush1.msra.mxu0 %v449
        %497 = vmatprep.subr.mxu0 %v453
        %498 = vmatpush1.msra.mxu0 %v452
        %499 = vmatprep.subr.mxu0 %v456
        %500 = vmatpush1.msra.mxu0 %v455
        %501 = vmatprep.subr.mxu0 %v459
        %502 = vmatpush1.msra.mxu0 %v458
        %503 = vmatprep.subr.mxu0 %v462
        %504 = vmatpush1.msra.mxu0 %v461
        %505 = vmatprep.subr.mxu0 %v465
        %506 = vmatpush1.msra.mxu0 %v464
        %507 = vmatprep.subr.mxu0 %v468
        %508 = vmatpush1.msra.mxu0 %v467
        %509 = vmatprep.subr.mxu0 %v471
        %510 = vmatpush1.msra.mxu0 %v470
        %511 = vmatprep.subr.mxu0 %v474
        %512 = vmatpush1.msra.mxu0 %v473
        %513 = vmatprep.subr.mxu0 %v477
        %514 = vmatpush1.msra.mxu0 %v476
        %515 = vmatprep.subr.mxu0 %v480
        %516 = vmatpush1.msra.mxu0 %v479
        %517 = vmatprep.subr.mxu0 %v483
        %518 = vmatpush1.msra.mxu0 %v482
        %519 = vmatprep.subr.mxu0 %v486
        %520 = vmatpush1.msra.mxu0 %v485
        %521 = vmatprep.subr.mxu0 %v489
        %522 = vmatpush1.msra.mxu0 %v488
        %523 = vmatprep.subr.mxu0 0.0
        %524 = vmatpush1.msra.mxu0 0.0
        %525 = vmatprep.subr.mxu0 0.0
        %526 = vmatpush1.msra.mxu0 0.0
        %527 = vmatprep.subr.mxu0 0.0
        %528 = vmatpush1.msra.mxu0 0.0
        %529 = vmatprep.subr.mxu0 0.0
        %530 = vmatpush1.msra.mxu0 0.0
        %531 = vmatprep.subr.mxu0 0.0
        %532 = vmatpush1.msra.mxu0 0.0
        %533 = vmatprep.subr.mxu0 0.0
        %534 = vmatpush1.msra.mxu0 0.0
        %535 = vmatprep.subr.mxu0 0.0
        %536 = vmatpush1.msra.mxu0 0.0
        %537 = vmatprep.subr.mxu0 0.0
        %538 = vmatpush1.msra.mxu0 0.0
        %539 = vmatprep.subr.mxu0 0.0
        %540 = vmatpush1.msra.mxu0 0.0
        %541 = vmatprep.subr.mxu0 0.0
        %542 = vmatpush1.msra.mxu0 0.0
        %543 = vmatprep.subr.mxu0 0.0
        %544 = vmatpush1.msra.mxu0 0.0
        %545 = vmatprep.subr.mxu0 0.0
        %546 = vmatpush1.msra.mxu0 0.0
        %547 = vmatprep.subr.mxu0 0.0
        %548 = vmatpush1.msra.mxu0 0.0
        %549 = vmatprep.subr.mxu0 0.0
        %550 = vmatpush1.msra.mxu0 0.0
        %551 = vmatprep.subr.mxu0 0.0
        %552 = vmatpush1.msra.mxu0 0.0
        %553 = vmatprep.subr.mxu0 0.0
        %554 = vmatpush1.msra.mxu0 0.0
        %555 = vmatprep.mubr.f32.mxu0 0.0
        %556 = vmatmul.mubr.f32.gmra.mrb[0].mxu0 %v436
        %v557 = vpop.f32.mrb[0].mxu0
        %v558 = vadd.f32 0.0, %v557
        %v559 = vpop.f32.mrb[0].mxu0
        %v560 = vadd.f32 0.0, %v559
        %561 = vdwg.mxu0
        %562 = vmatprep.subr.mxu0 0.0
        %563 = vmatpush1.msra.mxu0 %v445
        %564 = vmatprep.subr.mxu0 0.0
        %565 = vmatpush1.msra.mxu0 %v448
        %566 = vmatprep.subr.mxu0 0.0
        %567 = vmatpush1.msra.mxu0 %v451
        %568 = vmatprep.subr.mxu0 0.0
        %569 = vmatpush1.msra.mxu0 %v454
        %570 = vmatprep.subr.mxu0 0.0
        %571 = vmatpush1.msra.mxu0 %v457
        %572 = vmatprep.subr.mxu0 0.0
        %573 = vmatpush1.msra.mxu0 %v460
        %574 = vmatprep.subr.mxu0 0.0
        %575 = vmatpush1.msra.mxu0 %v463
        %576 = vmatprep.subr.mxu0 0.0
        %577 = vmatpush1.msra.mxu0 %v466
        %578 = vmatprep.subr.mxu0 0.0
        %579 = vmatpush1.msra.mxu0 %v469
        %580 = vmatprep.subr.mxu0 0.0
        %581 = vmatpush1.msra.mxu0 %v472
        %582 = vmatprep.subr.mxu0 0.0
        %583 = vmatpush1.msra.mxu0 %v475
        %584 = vmatprep.subr.mxu0 0.0
        %585 = vmatpush1.msra.mxu0 %v478
        %586 = vmatprep.subr.mxu0 0.0
        %587 = vmatpush1.msra.mxu0 %v481
        %588 = vmatprep.subr.mxu0 0.0
        %589 = vmatpush1.msra.mxu0 %v484
        %590 = vmatprep.subr.mxu0 0.0
        %591 = vmatpush1.msra.mxu0 %v487
        %592 = vmatprep.subr.mxu0 0.0
        %593 = vmatpush1.msra.mxu0 %v490
        %594 = vmatprep.subr.mxu0 0.0
        %595 = vmatpush1.msra.mxu0 0.0
        %596 = vmatprep.subr.mxu0 0.0
        %597 = vmatpush1.msra.mxu0 0.0
        %598 = vmatprep.subr.mxu0 0.0
        %599 = vmatpush1.msra.mxu0 0.0
        %600 = vmatprep.subr.mxu0 0.0
        %601 = vmatpush1.msra.mxu0 0.0
        %602 = vmatprep.subr.mxu0 0.0
        %603 = vmatpush1.msra.mxu0 0.0
        %604 = vmatprep.subr.mxu0 0.0
        %605 = vmatpush1.msra.mxu0 0.0
        %606 = vmatprep.subr.mxu0 0.0
        %607 = vmatpush1.msra.mxu0 0.0
        %608 = vmatprep.subr.mxu0 0.0
        %609 = vmatpush1.msra.mxu0 0.0
        %610 = vmatprep.subr.mxu0 0.0
        %611 = vmatpush1.msra.mxu0 0.0
        %612 = vmatprep.subr.mxu0 0.0
        %613 = vmatpush1.msra.mxu0 0.0
        %614 = vmatprep.subr.mxu0 0.0
        %615 = vmatpush1.msra.mxu0 0.0
        %616 = vmatprep.subr.mxu0 0.0
        %617 = vmatpush1.msra.mxu0 0.0
        %618 = vmatprep.subr.mxu0 0.0
        %619 = vmatpush1.msra.mxu0 0.0
        %620 = vmatprep.subr.mxu0 0.0
        %621 = vmatpush1.msra.mxu0 0.0
        %622 = vmatprep.subr.mxu0 0.0
        %623 = vmatpush1.msra.mxu0 0.0
        %624 = vmatprep.subr.mxu0 0.0
        %625 = vmatpush1.msra.mxu0 0.0
        %626 = vmatprep.mubr.f32.mxu0 0.0
        %627 = vmatmul.mubr.f32.gmra.mrb[0].mxu0 %v436
        %v628 = vpop.f32.mrb[0].mxu0
        %v629 = vadd.f32 0.0, %v628
        %v630 = vpop.f32.mrb[0].mxu0
        %631 = vdwg.mxu0
        %v632 = vadd.f32 %v440, %v558
        %v633 = vxor.u32 %v632, 2147483648
        %v634 = vmul.f32 %v633, 1.442695
        %v635 = vpow.pop %v634
        %v636 = vadd.f32 %v635, 1.0
        %v637 = vrcp.pop %v636
        %v638 = vmul.f32 1.0, %v637
        %v639 = vadd.f32 %v441, %v560
        %v640 = vxor.u32 %v639, 2147483648
        %v641 = vmul.f32 %v640, 1.442695
        %v642 = vpow.pop %v641
        %v643 = vadd.f32 %v642, 1.0
        %v644 = vrcp.pop %v643
        %v645 = vmul.f32 1.0, %v644
        %v646 = vadd.f32 %v629, %v428
        %v647 = vmul.f32 %v638, %v646
        %v648 = vadd.f32 %v442, %v647
        %v649 = vtanh.pop %v648
        %v650 = vsub.f32 1.0, %v645
        %v651 = vmul.f32 %v650, %v649
        %v652 = vmul.f32 %v645, %v436
        %v653 = vadd.f32 %v651, %v652
        %s654 = sadd.s32 %s96, %s431
        %v655 = vstv %s654
        %vm656 = vcmp.lt.s32.totalorder %v655, %v422
        %v657 = vsel %vm656, 1, 0
        %658 = vset.pattern.permute.xlu0 0
        %659 = vperm.xlu0 %658, %v657
        %v660 = vpop.permute.xlu0 %659
        %vm661 = vcmp.eq.s32.totalorder %v660, 1
        %v662 = vsel %vm661, %v653, %v436
        %663 = vst [vmem:[#allocation3] sm:$0xff] %v662
      $region66: #{tpu_custom_call.1} parent=60 // loop_footer
        %s433 = sadd.s32 %s431, 1
      $region67: #{tpu_custom_call.1} parent=60 // loop_footer_branch
        %430 = sbr.rel target = $region63
      $region68: #{tpu_custom_call.1} parent=60 // loop_exit
        _
    $region61: #{tpu_custom_call.1} parent=1 // pred_fallthru
      _
    // Predicated region
    $region69: #{tpu_custom_call.1} parent=1 // pred_check
      %p664 = pneg %p90
    $region70: #{tpu_custom_call.1} parent=1 // pred_check_branch
      %666 = sbr.rel (%p664) target = $region72
    $region71: #{tpu_custom_call.1} parent=1 // pred_region
      %v667 = vld [vmem:[#allocation3] sm:$0xff]
      %v668 = vld [vmem:[#allocation12] sm:$0xff]
      %v669 = vld [vmem:[#allocation12 + $0x8] sm:$0xff]
      %v670 = vld [vmem:[#allocation12 + $0x10] sm:$0xff]
      %v671 = vld [vmem:[#allocation12 + $0x18] sm:$0xff]
      %v672 = vld [vmem:[#allocation12 + $0x20] sm:$0xff]
      %v673 = vld [vmem:[#allocation12 + $0x28] sm:$0xff]
      %v674 = vld [vmem:[#allocation12 + $0x30] sm:$0xff]
      %v675 = vld [vmem:[#allocation12 + $0x38] sm:$0xff]
      %v676 = vld [vmem:[#allocation12 + $0x40] sm:$0xff]
      %v677 = vld [vmem:[#allocation12 + $0x48] sm:$0xff]
      %v678 = vld [vmem:[#allocation12 + $0x50] sm:$0xff]
      %v679 = vld [vmem:[#allocation12 + $0x58] sm:$0xff]
      %v680 = vld [vmem:[#allocation12 + $0x60] sm:$0xff]
      %v681 = vld [vmem:[#allocation12 + $0x68] sm:$0xff]
      %v682 = vld [vmem:[#allocation12 + $0x70] sm:$0xff]
      %v683 = vld [vmem:[#allocation12 + $0x78] sm:$0xff]
      %v684 = vld [vmem:[%s9] sm:$0x1]
      %v686 = vlaneseq
      %v687 = vshrl.u32 %v686, 7
      %v688 = vsub.s32 0, %v687
      %v689 = vrot.slane %v684, %v688
      %691 = vmatprep.subr.mxu0 0.0
      %692 = vmatpush1.msra.mxu0 %v668
      %693 = vmatprep.subr.mxu0 0.0
      %694 = vmatpush1.msra.mxu0 %v669
      %695 = vmatprep.subr.mxu0 0.0
      %696 = vmatpush1.msra.mxu0 %v670
      %697 = vmatprep.subr.mxu0 0.0
      %698 = vmatpush1.msra.mxu0 %v671
      %699 = vmatprep.subr.mxu0 0.0
      %700 = vmatpush1.msra.mxu0 %v672
      %701 = vmatprep.subr.mxu0 0.0
      %702 = vmatpush1.msra.mxu0 %v673
      %703 = vmatprep.subr.mxu0 0.0
      %704 = vmatpush1.msra.mxu0 %v674
      %705 = vmatprep.subr.mxu0 0.0
      %706 = vmatpush1.msra.mxu0 %v675
      %707 = vmatprep.subr.mxu0 0.0
      %708 = vmatpush1.msra.mxu0 %v676
      %709 = vmatprep.subr.mxu0 0.0
      %710 = vmatpush1.msra.mxu0 %v677
      %711 = vmatprep.subr.mxu0 0.0
      %712 = vmatpush1.msra.mxu0 %v678
      %713 = vmatprep.subr.mxu0 0.0
      %714 = vmatpush1.msra.mxu0 %v679
      %715 = vmatprep.subr.mxu0 0.0
      %716 = vmatpush1.msra.mxu0 %v680
      %717 = vmatprep.subr.mxu0 0.0
      %718 = vmatpush1.msra.mxu0 %v681
      %719 = vmatprep.subr.mxu0 0.0
      %720 = vmatpush1.msra.mxu0 %v682
      %721 = vmatprep.subr.mxu0 0.0
      %722 = vmatpush1.msra.mxu0 %v683
      %723 = vmatprep.subr.mxu0 0.0
      %724 = vmatpush1.msra.mxu0 0.0
      %725 = vmatprep.subr.mxu0 0.0
      %726 = vmatpush1.msra.mxu0 0.0
      %727 = vmatprep.subr.mxu0 0.0
      %728 = vmatpush1.msra.mxu0 0.0
      %729 = vmatprep.subr.mxu0 0.0
      %730 = vmatpush1.msra.mxu0 0.0
      %731 = vmatprep.subr.mxu0 0.0
      %732 = vmatpush1.msra.mxu0 0.0
      %733 = vmatprep.subr.mxu0 0.0
      %734 = vmatpush1.msra.mxu0 0.0
      %735 = vmatprep.subr.mxu0 0.0
      %736 = vmatpush1.msra.mxu0 0.0
      %737 = vmatprep.subr.mxu0 0.0
      %738 = vmatpush1.msra.mxu0 0.0
      %739 = vmatprep.subr.mxu0 0.0
      %740 = vmatpush1.msra.mxu0 0.0
      %741 = vmatprep.subr.mxu0 0.0
      %742 = vmatpush1.msra.mxu0 0.0
      %743 = vmatprep.subr.mxu0 0.0
      %744 = vmatpush1.msra.mxu0 0.0
      %745 = vmatprep.subr.mxu0 0.0
      %746 = vmatpush1.msra.mxu0 0.0
      %747 = vmatprep.subr.mxu0 0.0
      %748 = vmatpush1.msra.mxu0 0.0
      %749 = vmatprep.subr.mxu0 0.0
      %750 = vmatpush1.msra.mxu0 0.0
      %751 = vmatprep.subr.mxu0 0.0
      %752 = vmatpush1.msra.mxu0 0.0
      %753 = vmatprep.subr.mxu0 0.0
      %754 = vmatpush1.msra.mxu0 0.0
      %755 = vmatprep.mubr.f32.mxu0 0.0
      %756 = vmatmul.mubr.f32.gmra.mrb[0].mxu0 %v667
      %v757 = vpop.f32.mrb[0].mxu0
      %v758 = vadd.f32 %v689, %v757
      %v759 = vpop.f32.mrb[0].mxu0
      %760 = vdwg.mxu0
      %761 = vst [vmem:[#allocation14] sm:$0xff] %v758
    $region72: #{tpu_custom_call.1} parent=1 // pred_fallthru
      _
    // Predicated region
    $region73: #{tpu_custom_call.1} parent=1 // pred_check
      _
    $region74: #{tpu_custom_call.1} parent=1 // pred_check_branch
      %763 = sbr.rel (0) target = $region76
    $region75: #{tpu_custom_call.1} parent=1 // pred_region
      %s765 = ssub.s32 128, 128
      %766 = vsyncadd [#allocation8], %s765
      %s768 = sshll.u32 [#allocation14], 4
      %s769 = int_to_ptr.vmem [resolvable:$true] %s768
      %771 = dma.vmem_to_hbm [thread:$0]  %s769, 128, %s10, [#allocation8]
    $region76: #{tpu_custom_call.1} parent=1 // pred_fallthru
      _
    // Predicated region
    $region77: #{tpu_custom_call.1} parent=1 // pred_check
      _
    $region78: #{tpu_custom_call.1} parent=1 // pred_check_branch
      %773 = sbr.rel (0) target = $region80
    $region79: #{tpu_custom_call.1} parent=1 // pred_region
      %774 = dma.done [#allocation8], 128
    $region80: #{tpu_custom_call.1} parent=1 // pred_fallthru
      _
    %775 = vsyncpa [#allocation7], 1
    %776 = vsyncpa [#allocation10], 1
    %777 = vsyncpa [#allocation13], 1
    %778 = vsyncpa [#allocation8], 1

</llo_original>
